<compile_context>
chip_gen: v7x
topology: tpu7x:2x2x1
jax: 0.10.0
libtpu: 0.0.40
codegen_flags: <defaults>
</compile_context>

<pallas_src>
import math

import jax
import jax.numpy as jnp
from jax import lax
from jax.experimental import pallas as pl
from jax.experimental.pallas import tpu as pltpu


def _ffn_kernel(x_ref, w1_ref, b1_ref, w2_ref, b2_ref, o_ref, acc_ref):
    # Block shapes:
    #   x_ref : (block_rows, d_model)     w1_ref: (block_ff, d_model)   b1_ref: (1, block_ff)
    #   o_ref : (block_rows, d_model)     w2_ref: (d_model, block_ff)   b2_ref: (1, d_model)
    #   acc_ref: (block_rows, d_model) f32 VMEM scratch, resident across the k axis.
    k = pl.program_id(1)

    @pl.when(k == 0)
    def _():
        acc_ref[...] = jnp.zeros_like(acc_ref)

    # linear1 (k-tile of d_ff) + bias + ReLU, PyTorch-layout weights consumed
    # directly: x @ W1[k_tile, :].T  (MXU, f32 accumulation).
    h = lax.dot_general(
        x_ref[...], w1_ref[...],
        dimension_numbers=(((1,), (1,)), ((), ())),
        preferred_element_type=jnp.float32)
    h = jnp.maximum(h + b1_ref[...].astype(jnp.float32), 0.0)

    # dropout(p=0.1) is the identity in eval mode.

    # Accumulate this k-tile's contribution to linear2: h_k @ W2[:, k_tile].T.
    acc_ref[...] += lax.dot_general(
        h.astype(w2_ref.dtype), w2_ref[...],
        dimension_numbers=(((1,), (1,)), ((), ())),
        preferred_element_type=jnp.float32)

    # Epilogue only on the final reduction step: bias2 add, downcast, store.
    @pl.when(k == pl.num_programs(1) - 1)
    def _():
        o_ref[...] = (acc_ref[...] + b2_ref[...].astype(jnp.float32)).astype(o_ref.dtype)


def _round_up(n, m):
    return ((n + m - 1) // m) * m


def _pick_block_rows(M):
    # Tiny / ragged row counts: a single full-extent tile (block == full dim
    # satisfies the (8,128) rule).
    if M <= 8 or M % 8 != 0:
        return M
    # Prefer <=512-row tiles (weight-tile reuse on v6e) but guarantee at least
    # two tiles when M allows so dual-TensorCore chips (v7x) get parallel work
    # on the "parallel" row axis.
    return min(512, _round_up(pl.cdiv(M, 2), 8))


def _vmem_estimate(block_rows, d_model, block_ff, itemsize):
    """Rough VMEM footprint (bytes) for a given tiling: double-buffered
    pipeline blocks + f32 accumulator + f32 h chunk."""
    dbuf = 2
    x_t = block_rows * d_model * itemsize
    w1_t = block_ff * d_model * itemsize
    w2_t = d_model * block_ff * itemsize
    b1_t = block_ff * itemsize
    b2_t = d_model * itemsize
    out_t = block_rows * d_model * itemsize
    acc = block_rows * d_model * 4
    h_tmp = block_rows * block_ff * 4
    return dbuf * (x_t + w1_t + w2_t + b1_t + b2_t + out_t) + acc + h_tmp


def _pick_block_ff(d_ff, d_model, block_rows, itemsize, budget_bytes):
    # Lane axis tiles must be multiples of 128 (or the full dim), and must
    # divide d_ff exactly -- a padded trailing reduction tile would add
    # garbage contributions to the accumulator.
    if d_ff % 128 != 0:
        return d_ff
    cands = [d_ff] + [c for c in (4096, 2048, 1024, 512, 256, 128)
                      if c < d_ff and d_ff % c == 0]
    for c in cands:
        if _vmem_estimate(block_rows, d_model, c, itemsize) <= budget_bytes:
            return c
    return cands[-1]


def feed_forward(x, w1, b1, w2, b2, *, block_rows=None, block_ff=None,
                 vmem_budget_bytes=48 * 1024 * 1024):
    """x: (B, S, d_model). PyTorch nn.Linear layout params:
    w1: (d_ff, d_model), b1: (d_ff,), w2: (d_model, d_ff), b2: (d_model,)."""
    B, S, d_model = x.shape
    d_ff = w1.shape[0]
    assert w1.shape == (d_ff, d_model)
    assert b1.shape == (d_ff,)
    assert w2.shape == (d_model, d_ff)
    assert b2.shape == (d_model,)

    M = B * S
    x2 = x.reshape(M, d_model)
    # Biases as lane-dense (1, D_out) rows; no weight transposes (the kernel
    # consumes PyTorch layout directly via dot_general).
    b1_r = b1.reshape(1, d_ff)
    b2_r = b2.reshape(1, d_model)

    itemsize = jnp.dtype(x.dtype).itemsize
    if block_rows is None:
        block_rows = _pick_block_rows(M)
    if block_ff is None:
        block_ff = _pick_block_ff(d_ff, d_model, block_rows, itemsize,
                                  vmem_budget_bytes)

    grid = (pl.cdiv(M, block_rows), pl.cdiv(d_ff, block_ff))

    x_spec = pl.BlockSpec((block_rows, d_model), lambda i, k: (i, 0))
    w1_spec = pl.BlockSpec((block_ff, d_model), lambda i, k: (k, 0))
    b1_spec = pl.BlockSpec((1, block_ff), lambda i, k: (0, k))
    w2_spec = pl.BlockSpec((d_model, block_ff), lambda i, k: (0, k))
    b2_spec = pl.BlockSpec((1, d_model), lambda i, k: (0, 0))
    o_spec = pl.BlockSpec((block_rows, d_model), lambda i, k: (i, 0))

    # Advisory cost hint for XLA's scheduler (2 matmuls, 2 flops/MAC).
    nbytes = lambda a: a.size * jnp.dtype(a.dtype).itemsize
    cost = pl.CostEstimate(
        flops=4 * M * d_model * d_ff,
        transcendentals=0,
        bytes_accessed=(nbytes(x2) + nbytes(w1) + nbytes(b1) + nbytes(w2)
                        + nbytes(b2) + M * d_model * itemsize))

    out2 = pl.pallas_call(
        _ffn_kernel,
        out_shape=jax.ShapeDtypeStruct((M, d_model), x.dtype),
        grid_spec=pltpu.PrefetchScalarGridSpec(
            num_scalar_prefetch=0,
            grid=grid,
            in_specs=[x_spec, w1_spec, b1_spec, w2_spec, b2_spec],
            out_specs=o_spec,
            scratch_shapes=[pltpu.VMEM((block_rows, d_model), jnp.float32)],
        ),
        compiler_params=pltpu.CompilerParams(
            dimension_semantics=("parallel", "arbitrary"),
            vmem_limit_bytes=64 * 1024 * 1024,
        ),
        cost_estimate=cost,
    )(x2, w1, b1_r, w2, b2_r)

    return out2.reshape(B, S, d_model)


def _reference_ffn(x, w1, b1, w2, b2):
    """Plain-JAX reference mirroring the PyTorch forward (eval mode), f32."""
    h = x @ w1.T + b1
    h = jnp.maximum(h, 0.0)
    return h @ w2.T + b2


if __name__ == "__main__":
    B, S, D_MODEL, D_FF = 2, 8, 32, 64

    key0 = jax.random.PRNGKey(0)
    k_x, k_w1, k_b1, k_w2, k_b2 = jax.random.split(key0, 5)

    x = jax.random.normal(k_x, (B, S, D_MODEL), dtype=jnp.float32)

    # nn.Linear default init: U(-1/sqrt(fan_in), 1/sqrt(fan_in)) for W and b.
    bound1 = 1.0 / math.sqrt(D_MODEL)
    w1 = jax.random.uniform(k_w1, (D_FF, D_MODEL), jnp.float32, -bound1, bound1)
    b1 = jax.random.uniform(k_b1, (D_FF,), jnp.float32, -bound1, bound1)
    bound2 = 1.0 / math.sqrt(D_FF)
    w2 = jax.random.uniform(k_w2, (D_MODEL, D_FF), jnp.float32, -bound2, bound2)
    b2 = jax.random.uniform(k_b2, (D_MODEL,), jnp.float32, -bound2, bound2)

    ref = _reference_ffn(x, w1, b1, w2, b2)

    # f32 path: matches the PyTorch module (eval mode) to tight tolerance.
    out = jax.block_until_ready(feed_forward(x, w1, b1, w2, b2))
    assert out.shape == (B, S, D_MODEL)
    assert jnp.allclose(out, ref, atol=1e-4, rtol=1e-4), "f32 mismatch vs JAX reference"

    # bf16 path: MXU-native operands with f32 accumulation (looser tolerance).
    bf = jnp.bfloat16
    out_bf16 = jax.block_until_ready(
        feed_forward(x.astype(bf), w1.astype(bf), b1.astype(bf),
                     w2.astype(bf), b2.astype(bf)))
    assert out_bf16.dtype == bf
    assert jnp.allclose(out_bf16.astype(jnp.float32), ref,
                        atol=7.5e-2, rtol=7.5e-2), "bf16 mismatch vs JAX reference"

    print("KERNEL_OK")
</pallas_src>

<mosaic_0001>
module attributes {stable_mosaic.version = 11 : i64} {
  func.func @_ffn_kernel(%arg0: i32, %arg1: i32, %arg2: memref<8x32xf32, #tpu.memory_space<vmem>>, %arg3: memref<64x32xf32, #tpu.memory_space<vmem>>, %arg4: memref<1x64xf32, #tpu.memory_space<vmem>>, %arg5: memref<32x64xf32, #tpu.memory_space<vmem>>, %arg6: memref<1x32xf32, #tpu.memory_space<vmem>>, %arg7: memref<8x32xf32, #tpu.memory_space<vmem>>, %arg8: memref<8x32xf32, #tpu.memory_space<vmem>>) attributes {dimension_semantics = [#tpu.dimension_semantics<parallel>, #tpu.dimension_semantics<arbitrary>], iteration_bounds = array<i64: 2, 1>, scalar_prefetch = 0 : i64, scratch_operands = 1 : i64, tpu.core_type = #tpu.core_type<tc>, window_params = [{transform_indices = @transform_0, window_bounds = array<i64: 8, 32>}, {transform_indices = @transform_1, window_bounds = array<i64: 64, 32>}, {transform_indices = @transform_2, window_bounds = array<i64: 1, 64>}, {transform_indices = @transform_3, window_bounds = array<i64: 32, 64>}, {pipeline_mode = #tpu.pipeline_mode<synchronous>, transform_indices = @transform_4, window_bounds = array<i64: 1, 32>}, {transform_indices = @transform_5, window_bounds = array<i64: 8, 32>}]} {
    %c0_i32 = arith.constant 0 : i32
    %0 = arith.cmpi eq, %arg1, %c0_i32 : i32
    %1 = arith.extui %0 : i1 to i32
    %c0_i32_0 = arith.constant 0 : i32
    %2 = arith.cmpi ne, %1, %c0_i32_0 : i32
    scf.if %2 {
      %cst_16 = arith.constant 0.000000e+00 : f32
      %19 = vector.broadcast %cst_16 : f32 to vector<8x32xf32>
      %c0_17 = arith.constant 0 : index
      %c0_18 = arith.constant 0 : index
      %20 = vector.load %arg8[%c0_17, %c0_18] : memref<8x32xf32, #tpu.memory_space<vmem>>, vector<8x32xf32>
      tpu.vector_store %arg8[%c0_17, %c0_18], %19 {strides = array<i32>} : memref<8x32xf32, #tpu.memory_space<vmem>>, vector<8x32xf32>,
    } else {
    }
    %c0 = arith.constant 0 : index
    %c0_1 = arith.constant 0 : index
    %3 = vector.load %arg2[%c0, %c0_1] : memref<8x32xf32, #tpu.memory_space<vmem>>, vector<8x32xf32>
    %c0_2 = arith.constant 0 : index
    %c0_3 = arith.constant 0 : index
    %4 = vector.load %arg3[%c0_2, %c0_3] : memref<64x32xf32, #tpu.memory_space<vmem>>, vector<64x32xf32>
    %cst = arith.constant dense<0.000000e+00> : vector<8x64xf32>
    %5 = tpu.matmul %3, %4, %cst {dimension_numbers = #tpu.dot_dimension_numbers<[1], [1], [0], [0], [0, 0, 1, 0], [], []>} : vector<8x32xf32>, vector<64x32xf32>, vector<8x64xf32> -> vector<8x64xf32>
    %c0_4 = arith.constant 0 : index
    %c0_5 = arith.constant 0 : index
    %6 = vector.load %arg4[%c0_4, %c0_5] : memref<1x64xf32, #tpu.memory_space<vmem>>, vector<1x64xf32>
    %7 = vector.broadcast %6 : vector<1x64xf32> to vector<8x64xf32>
    %8 = arith.addf %5, %7 : vector<8x64xf32>
    %cst_6 = arith.constant 0.000000e+00 : f32
    %9 = vector.broadcast %cst_6 : f32 to vector<8x64xf32>
    %10 = arith.maximumf %8, %9 : vector<8x64xf32>
    %c0_7 = arith.constant 0 : index
    %c0_8 = arith.constant 0 : index
    %11 = vector.load %arg8[%c0_7, %c0_8] : memref<8x32xf32, #tpu.memory_space<vmem>>, vector<8x32xf32>
    %c0_9 = arith.constant 0 : index
    %c0_10 = arith.constant 0 : index
    %12 = vector.load %arg5[%c0_9, %c0_10] : memref<32x64xf32, #tpu.memory_space<vmem>>, vector<32x64xf32>
    %cst_11 = arith.constant dense<0.000000e+00> : vector<8x32xf32>
    %13 = tpu.matmul %10, %12, %cst_11 {dimension_numbers = #tpu.dot_dimension_numbers<[1], [1], [0], [0], [0, 0, 1, 0], [], []>} : vector<8x64xf32>, vector<32x64xf32>, vector<8x32xf32> -> vector<8x32xf32>
    %14 = arith.addf %11, %13 : vector<8x32xf32>
    %c0_12 = arith.constant 0 : index
    %c0_13 = arith.constant 0 : index
    %15 = vector.load %arg8[%c0_12, %c0_13] : memref<8x32xf32, #tpu.memory_space<vmem>>, vector<8x32xf32>
    tpu.vector_store %arg8[%c0_12, %c0_13], %14 {strides = array<i32>} : memref<8x32xf32, #tpu.memory_space<vmem>>, vector<8x32xf32>,
    %c0_i32_14 = arith.constant 0 : i32
    %16 = arith.cmpi eq, %arg1, %c0_i32_14 : i32
    %17 = arith.extui %16 : i1 to i32
    %c0_i32_15 = arith.constant 0 : i32
    %18 = arith.cmpi ne, %17, %c0_i32_15 : i32
    scf.if %18 {
      %c0_16 = arith.constant 0 : index
      %c0_17 = arith.constant 0 : index
      %19 = vector.load %arg8[%c0_16, %c0_17] : memref<8x32xf32, #tpu.memory_space<vmem>>, vector<8x32xf32>
      %c0_18 = arith.constant 0 : index
      %c0_19 = arith.constant 0 : index
      %20 = vector.load %arg6[%c0_18, %c0_19] : memref<1x32xf32, #tpu.memory_space<vmem>>, vector<1x32xf32>
      %21 = vector.broadcast %20 : vector<1x32xf32> to vector<8x32xf32>
      %22 = arith.addf %19, %21 : vector<8x32xf32>
      %c0_20 = arith.constant 0 : index
      %c0_21 = arith.constant 0 : index
      %23 = vector.load %arg7[%c0_20, %c0_21] : memref<8x32xf32, #tpu.memory_space<vmem>>, vector<8x32xf32>
      tpu.vector_store %arg7[%c0_20, %c0_21], %22 {strides = array<i32>} : memref<8x32xf32, #tpu.memory_space<vmem>>, vector<8x32xf32>,
    } else {
    }
    return
  }
  func.func @transform_0(%arg0: i32, %arg1: i32) -> (i32, i32) {
    %c0_i32 = arith.constant 0 : i32
    %c0_i32_0 = arith.constant 0 : i32
    return %arg0, %c0_i32 : i32, i32
  }
  func.func @transform_1(%arg0: i32, %arg1: i32) -> (i32, i32) {
    %c0_i32 = arith.constant 0 : i32
    %c0_i32_0 = arith.constant 0 : i32
    return %arg1, %c0_i32 : i32, i32
  }
  func.func @transform_2(%arg0: i32, %arg1: i32) -> (i32, i32) {
    %c0_i32 = arith.constant 0 : i32
    %c0_i32_0 = arith.constant 0 : i32
    return %c0_i32, %arg1 : i32, i32
  }
  func.func @transform_3(%arg0: i32, %arg1: i32) -> (i32, i32) {
    %c0_i32 = arith.constant 0 : i32
    %c0_i32_0 = arith.constant 0 : i32
    return %c0_i32, %arg1 : i32, i32
  }
  func.func @transform_4(%arg0: i32, %arg1: i32) -> (i32, i32) {
    %c0_i32 = arith.constant 0 : i32
    %c0_i32_0 = arith.constant 0 : i32
    %c0_i32_1 = arith.constant 0 : i32
    return %c0_i32, %c0_i32_0 : i32, i32
  }
  func.func @transform_5(%arg0: i32, %arg1: i32) -> (i32, i32) {
    %c0_i32 = arith.constant 0 : i32
    %c0_i32_0 = arith.constant 0 : i32
    return %arg0, %c0_i32 : i32, i32
  }
}

</mosaic_0001>

<llo_original>
// kernel: tpu_custom_call.1
$region0: #{tpu_custom_call.1}
  #allocation0 [shape = 'u32[]', space=smem, size = 0x4, offset = 0x4, fixed_abs, tag = 'smem constant byte address 0x4 - core index']
  #allocation1 [shape = 'u32[144,128]{1,0:T(1,128)}', space=vmem, size = 0x12000, scoped, tag = 'internal scratch']
  #allocation2 [shape = 'f32[8,32]{1,0:T(8,128)}', space=vmem, size = 0x1000, scoped, tag = 'scratch operand']
  %s0 = inlined_call_operand.hbm [shape: f32[16,32], index: 0, kind: input, shape index: {}]
  %s1 = inlined_call_operand.hbm [shape: f32[64,32], index: 1, kind: input, shape index: {}]
  %s2 = inlined_call_operand.hbm [shape: f32[1,64], index: 2, kind: input, shape index: {}]
  %s3 = inlined_call_operand.hbm [shape: f32[32,64], index: 3, kind: input, shape index: {}]
  %s4 = inlined_call_operand.hbm [shape: f32[1,32], index: 4, kind: input, shape index: {}]
  %s5 = inlined_call_operand.hbm [shape: f32[16,32], index: 5, kind: output, shape index: {}]
  %s6 = sld [smem:[#allocation0]]
  $region81: #{tpu_custom_call.1} parent=0
    _
  %s8 = ssub.s32 1, %s6
  %s9 = scalar_select 0, %s8, %s6
  $region1: #{tpu_custom_call.1} parent=0
    #allocation3 [shape = 'u8[8192]{0}', space=vmem, size = 0x2000, scoped, tag = 'input window, operand 0']
    #allocation4 [shape = 's32[2]{0}', space=sflag, size = 0x8, scoped, tag = 'scoped memory for tpu_custom_call.1']
    #allocation5 [shape = 's32[2]{0}', space=sflag, size = 0x8, scoped, tag = 'scoped memory for tpu_custom_call.1']
    #allocation6 [shape = 'u8[32768]{0}', space=vmem, size = 0x8000, scoped, tag = 'input window, operand 1, single buffered']
    #allocation7 [shape = 's32[1]{0}', space=sflag, size = 0x4, scoped, tag = 'scoped memory for tpu_custom_call.1']
    #allocation8 [shape = 'u8[512]{0}', space=vmem, size = 0x400, scoped, tag = 'input window, operand 2, single buffered']
    #allocation9 [shape = 'u8[16384]{0}', space=vmem, size = 0x4000, scoped, tag = 'input window, operand 3, single buffered']
    #allocation10 [shape = 's32[1]{0}', space=sflag, size = 0x4, scoped, tag = 'scoped memory for tpu_custom_call.1']
    #allocation11 [shape = 'u8[512]{0}', space=vmem, size = 0x400, scoped, tag = 'input window, operand 4, single buffered']
    #allocation12 [shape = 'u8[8192]{0}', space=vmem, size = 0x2000, scoped, tag = 'output window, operand 0']
    %10 = vsyncpa [#allocation4], 0
    %s11 = scalar_lea.sflag [#allocation4], 1
    %12 = vsyncpa %s11, 0
    %13 = vsyncpa [#allocation7], 0
    %14 = vsyncpa [#allocation10], 0
    %15 = vsyncpa [#allocation5], 0
    %s16 = scalar_lea.sflag [#allocation5], 1
    %17 = vsyncpa %s16, 0
    loop: start=0, step=1, limit=4
    $region2: #{tpu_custom_call.1} parent=1 // loop_pre_header
      _
    $region3: #{tpu_custom_call.1} parent=1 // loop_header
      %s19 = sphi 0, %s23
      %p20 = scmp.ge.s32.totalorder %s19, 4
      %s26 = sphi 0, %s38
      %s27 = sphi 0, %s34
      %s28 = sphi 0, %s26
      %s29 = sphi 0, %s27
      %s30 = sphi 0, %s28
      %s31 = sphi 0, %s29
      %s41 = sphi 0, %s43
      %s44 = sphi 0, %s41
      %s45 = sphi 0, %s44
      %s61 = sphi 0, %s45
      %s67 = sphi 0, %s69
      %s70 = sphi 0, %s67
      %s71 = sphi 0, %s70
      %s87 = sphi 0, %s71
      %s93 = sphi 0, %s95
      %s96 = sphi 0, %s93
      %s97 = sphi 0, %s96
      %s113 = sphi 0, %s97
      %s119 = sphi 0, %s121
      %s122 = sphi 0, %s119
      %s123 = sphi 0, %s122
      %s139 = sphi 0, %s123
      %s143 = sphi 0, %s143
      %s145 = sphi 0, %s143
      %s146 = sphi 0, %s145
      %s160 = sphi 0, %s146
      %s166 = sphi 0, %s168
      %s169 = sphi 0, %s166
      %s170 = sphi 0, %s169
      %s186 = sphi 0, %s170
    $region4: #{tpu_custom_call.1} parent=1 // loop_header_branch
      %22 = sbr.rel (%p20) target = $region8
    $region5: #{tpu_custom_call.1} parent=1 // loop_body
      %s24 = ssub.s32 %s19, 1
      %s25 = ssub.s32 %s19, 2
      %s32 = sadd.s32 1, %s27
      %p33 = scmp.ge.s32.totalorder %s32, 1
      %s34 = scalar_select %p33, 0, %s32
      %s35 = sadd.s32 1, %s26
      %s36 = scalar_select %p33, %s35, %s26
      %p37 = scmp.ge.s32.totalorder %s36, 2
      %s38 = scalar_select %p37, 0, %s36
      %s39 = ssub.s32 %s26, %s38
      %p40 = scmp.eq.s32.totalorder %s39, 0
      %s42 = sadd.s32 %s41, 1
      %s43 = scalar_select %p40, %s41, %s42
      %p46 = pneg %p40
      %p47 = scmp.eq.s32.totalorder %s19, 1
      %p48 = por %p46, %p47
      %p49 = scmp.ne.s32.totalorder %s41, %s44
      %p50 = scmp.eq.s32.totalorder %s19, 0
      %p51 = por %p49, %p50
      %p52 = scmp.ne.s32.totalorder %s41, %s44
      %p53 = scmp.eq.s32.totalorder %s24, 1
      %p54 = por %p52, %p53
      %p55 = scmp.ne.s32.totalorder %s44, %s45
      %p56 = scmp.eq.s32.totalorder %s24, 0
      %p57 = por %p55, %p56
      %p58 = scmp.ne.s32.totalorder %s44, %s45
      %p59 = scmp.eq.s32.totalorder %s25, 1
      %p60 = por %p58, %p59
      %p62 = scmp.ne.s32.totalorder %s45, %s61
      %p63 = scmp.eq.s32.totalorder %s25, 0
      %p64 = por %p62, %p63
      %s65 = ssub.s32 %s27, %s34
      %p66 = scmp.eq.s32.totalorder %s65, 0
      %s68 = sadd.s32 %s67, 1
      %s69 = scalar_select %p66, %s67, %s68
      %p72 = pneg %p66
      %p73 = scmp.eq.s32.totalorder %s19, 1
      %p74 = por %p72, %p73
      %p75 = scmp.ne.s32.totalorder %s67, %s70
      %p76 = scmp.eq.s32.totalorder %s19, 0
      %p77 = por %p75, %p76
      %p78 = scmp.ne.s32.totalorder %s67, %s70
      %p79 = scmp.eq.s32.totalorder %s24, 1
      %p80 = por %p78, %p79
      %p81 = scmp.ne.s32.totalorder %s70, %s71
      %p82 = scmp.eq.s32.totalorder %s24, 0
      %p83 = por %p81, %p82
      %p84 = scmp.ne.s32.totalorder %s70, %s71
      %p85 = scmp.eq.s32.totalorder %s25, 1
      %p86 = por %p84, %p85
      %p88 = scmp.ne.s32.totalorder %s71, %s87
      %p89 = scmp.eq.s32.totalorder %s25, 0
      %p90 = por %p88, %p89
      %s91 = ssub.s32 %s27, %s34
      %p92 = scmp.eq.s32.totalorder %s91, 0
      %s94 = sadd.s32 %s93, 1
      %s95 = scalar_select %p92, %s93, %s94
      %p98 = pneg %p92
      %p99 = scmp.eq.s32.totalorder %s19, 1
      %p100 = por %p98, %p99
      %p101 = scmp.ne.s32.totalorder %s93, %s96
      %p102 = scmp.eq.s32.totalorder %s19, 0
      %p103 = por %p101, %p102
      %p104 = scmp.ne.s32.totalorder %s93, %s96
      %p105 = scmp.eq.s32.totalorder %s24, 1
      %p106 = por %p104, %p105
      %p107 = scmp.ne.s32.totalorder %s96, %s97
      %p108 = scmp.eq.s32.totalorder %s24, 0
      %p109 = por %p107, %p108
      %p110 = scmp.ne.s32.totalorder %s96, %s97
      %p111 = scmp.eq.s32.totalorder %s25, 1
      %p112 = por %p110, %p111
      %p114 = scmp.ne.s32.totalorder %s97, %s113
      %p115 = scmp.eq.s32.totalorder %s25, 0
      %p116 = por %p114, %p115
      %s117 = ssub.s32 %s27, %s34
      %p118 = scmp.eq.s32.totalorder %s117, 0
      %s120 = sadd.s32 %s119, 1
      %s121 = scalar_select %p118, %s119, %s120
      %p124 = pneg %p118
      %p125 = scmp.eq.s32.totalorder %s19, 1
      %p126 = por %p124, %p125
      %p127 = scmp.ne.s32.totalorder %s119, %s122
      %p128 = scmp.eq.s32.totalorder %s19, 0
      %p129 = por %p127, %p128
      %p130 = scmp.ne.s32.totalorder %s119, %s122
      %p131 = scmp.eq.s32.totalorder %s24, 1
      %p132 = por %p130, %p131
      %p133 = scmp.ne.s32.totalorder %s122, %s123
      %p134 = scmp.eq.s32.totalorder %s24, 0
      %p135 = por %p133, %p134
      %p136 = scmp.ne.s32.totalorder %s122, %s123
      %p137 = scmp.eq.s32.totalorder %s25, 1
      %p138 = por %p136, %p137
      %p140 = scmp.ne.s32.totalorder %s123, %s139
      %p141 = scmp.eq.s32.totalorder %s25, 0
      %p142 = por %p140, %p141
      %s144 = sadd.s32 %s143, 1
      %p147 = scmp.eq.s32.totalorder %s19, 1
      %p148 = scmp.ne.s32.totalorder %s143, %s145
      %p149 = scmp.eq.s32.totalorder %s19, 0
      %p150 = por %p148, %p149
      %p151 = scmp.ne.s32.totalorder %s143, %s145
      %p152 = scmp.eq.s32.totalorder %s24, 1
      %p153 = por %p151, %p152
      %p154 = scmp.ne.s32.totalorder %s145, %s146
      %p155 = scmp.eq.s32.totalorder %s24, 0
      %p156 = por %p154, %p155
      %p157 = scmp.ne.s32.totalorder %s145, %s146
      %p158 = scmp.eq.s32.totalorder %s25, 1
      %p159 = por %p157, %p158
      %p161 = scmp.ne.s32.totalorder %s146, %s160
      %p162 = scmp.eq.s32.totalorder %s25, 0
      %p163 = por %p161, %p162
      %s164 = ssub.s32 %s26, %s38
      %p165 = scmp.eq.s32.totalorder %s164, 0
      %s167 = sadd.s32 %s166, 1
      %s168 = scalar_select %p165, %s166, %s167
      %p171 = pneg %p165
      %p172 = scmp.eq.s32.totalorder %s19, 1
      %p173 = por %p171, %p172
      %p174 = scmp.ne.s32.totalorder %s166, %s169
      %p175 = scmp.eq.s32.totalorder %s19, 0
      %p176 = por %p174, %p175
      %p177 = scmp.ne.s32.totalorder %s166, %s169
      %p178 = scmp.eq.s32.totalorder %s24, 1
      %p179 = por %p177, %p178
      %p180 = scmp.ne.s32.totalorder %s169, %s170
      %p181 = scmp.eq.s32.totalorder %s24, 0
      %p182 = por %p180, %p181
      %p183 = scmp.ne.s32.totalorder %s169, %s170
      %p184 = scmp.eq.s32.totalorder %s25, 1
      %p185 = por %p183, %p184
      %p187 = scmp.ne.s32.totalorder %s170, %s186
      %p188 = scmp.eq.s32.totalorder %s25, 0
      %p189 = por %p187, %p188
      %p190 = scmp.le.s32.totalorder 1, %s19
      %p191 = scmp.lt.s32.totalorder %s19, 3
      %p192 = pnand %p190, %p191
      %p193 = pneg %p192
      // Predicated region
      $region9: #{tpu_custom_call.1} parent=5 // pred_check
        _
      $region10: #{tpu_custom_call.1} parent=5 // pred_check_branch
        %195 = sbr.rel (%p192) target = $region12
      $region11: #{tpu_custom_call.1} parent=5 // pred_region
        %s196 = ssub.s32 %s19, 1
        // Predicated region
        $region13: #{tpu_custom_call.1} parent=11 // pred_check
          %p197 = pneg %p83
        $region14: #{tpu_custom_call.1} parent=11 // pred_check_branch
          %199 = sbr.rel (%p197) target = $region16
        $region15: #{tpu_custom_call.1} parent=11 // pred_region
          %s200 = smul.u32 8, %s29
          %s202 = ssub.s32 1024, 1024
          %203 = vsyncadd [#allocation7], %s202
          %s204 = smul.addr %s200, 128
          %s205 = scalar_lea.hbm %s1, %s204
          %s206 = sshll.u32 [#allocation6], 4
          %s207 = int_to_ptr.vmem [resolvable:$true] %s206
          %212 = dma.hbm_to_vmem [thread:$0]  %s205, 1024, %s207, [#allocation7], 128, 128, 8
        $region16: #{tpu_custom_call.1} parent=11 // pred_fallthru
          _
        // Predicated region
        $region17: #{tpu_custom_call.1} parent=11 // pred_check
          %p213 = pneg %p109
        $region18: #{tpu_custom_call.1} parent=11 // pred_check_branch
          %215 = sbr.rel (%p213) target = $region20
        $region19: #{tpu_custom_call.1} parent=11 // pred_region
          %s217 = ssub.s32 16, 16
          %218 = vsyncadd [#allocation7], %s217
          %s219 = smul.addr %s29, 16
          %s220 = scalar_lea.hbm %s2, %s219
          %s222 = sshll.u32 [#allocation8], 4
          %s223 = int_to_ptr.vmem [resolvable:$true] %s222
          %225 = dma.hbm_to_vmem [thread:$0]  %s220, 16, %s223, [#allocation7]
        $region20: #{tpu_custom_call.1} parent=11 // pred_fallthru
          _
        // Predicated region
        $region21: #{tpu_custom_call.1} parent=11 // pred_check
          %p226 = pneg %p135
        $region22: #{tpu_custom_call.1} parent=11 // pred_check_branch
          %228 = sbr.rel (%p226) target = $region24
        $region23: #{tpu_custom_call.1} parent=11 // pred_region
          %s230 = ssub.s32 512, 512
          %231 = vsyncadd [#allocation10], %s230
          %s232 = smul.addr %s29, 128
          %s233 = scalar_lea.hbm %s3, %s232
          %s234 = sshll.u32 [#allocation9], 4
          %s235 = int_to_ptr.vmem [resolvable:$true] %s234
          %240 = dma.hbm_to_vmem [thread:$0]  %s233, 512, %s235, [#allocation10], 128, 128, 8
        $region24: #{tpu_custom_call.1} parent=11 // pred_fallthru
          _
        // Predicated region
        $region25: #{tpu_custom_call.1} parent=11 // pred_check
          %p241 = pneg %p156
        $region26: #{tpu_custom_call.1} parent=11 // pred_check_branch
          %243 = sbr.rel (%p241) target = $region28
        $region27: #{tpu_custom_call.1} parent=11 // pred_region
          %s245 = ssub.s32 16, 16
          %246 = vsyncadd [#allocation10], %s245
          %s248 = sshll.u32 [#allocation11], 4
          %s249 = int_to_ptr.vmem [resolvable:$true] %s248
          %251 = dma.hbm_to_vmem [thread:$0]  %s4, 16, %s249, [#allocation10]
        $region28: #{tpu_custom_call.1} parent=11 // pred_fallthru
          _
      $region12: #{tpu_custom_call.1} parent=5 // pred_fallthru
        _
      %p252 = scmp.lt.s32.totalorder %s19, 2
      // Predicated region
      $region29: #{tpu_custom_call.1} parent=5 // pred_check
        %p253 = pneg %p252
      $region30: #{tpu_custom_call.1} parent=5 // pred_check_branch
        %255 = sbr.rel (%p253) target = $region32
      $region31: #{tpu_custom_call.1} parent=5 // pred_region
        // Predicated region
        $region33: #{tpu_custom_call.1} parent=31 // pred_check
          %p256 = pneg %p51
        $region34: #{tpu_custom_call.1} parent=31 // pred_check_branch
          %258 = sbr.rel (%p256) target = $region36
        $region35: #{tpu_custom_call.1} parent=31 // pred_region
          %s259 = sand.u32 %s41, 1
          %s260 = scalar_lea.sflag [#allocation4], %s259
          %s261 = sand.u32 %s41, 1
          %s262 = smul.addr %s261, 8
          %s263 = scalar_lea.vmem [#allocation3], %s262
          %s265 = ssub.s32 128, 128
          %266 = vsyncadd %s260, %s265
          %s267 = smul.addr %s26, 128
          %s268 = scalar_lea.hbm %s0, %s267
          %s270 = sshll.u32 %s263, 4
          %s271 = int_to_ptr.vmem [resolvable:$true] %s270
          %273 = dma.hbm_to_vmem [thread:$0]  %s268, 128, %s271, %s260
        $region36: #{tpu_custom_call.1} parent=31 // pred_fallthru
          _
      $region32: #{tpu_custom_call.1} parent=5 // pred_fallthru
        _
      %p274 = scmp.le.s32.totalorder 1, %s19
      %p275 = scmp.lt.s32.totalorder %s19, 3
      %p276 = pnand %p274, %p275
      %p277 = pneg %p276
      // Predicated region
      $region37: #{tpu_custom_call.1} parent=5 // pred_check
        _
      $region38: #{tpu_custom_call.1} parent=5 // pred_check_branch
        %279 = sbr.rel (%p276) target = $region40
      $region39: #{tpu_custom_call.1} parent=5 // pred_region
        %s280 = ssub.s32 %s19, 1
        %s281 = sand.u32 %s44, 1
        %s282 = scalar_lea.sflag [#allocation4], %s281
        %s283 = sand.u32 %s44, 1
        %s284 = smul.addr %s283, 8
        %s285 = scalar_lea.vmem [#allocation3], %s284
        // Predicated region
        $region41: #{tpu_custom_call.1} parent=39 // pred_check
          %p286 = pneg %p57
        $region42: #{tpu_custom_call.1} parent=39 // pred_check_branch
          %288 = sbr.rel (%p286) target = $region44
        $region43: #{tpu_custom_call.1} parent=39 // pred_region
          %289 = dma.done %s282, 128
        $region44: #{tpu_custom_call.1} parent=39 // pred_fallthru
          _
        // Predicated region
        $region45: #{tpu_custom_call.1} parent=39 // pred_check
          %p290 = pneg %p83
        $region46: #{tpu_custom_call.1} parent=39 // pred_check_branch
          %292 = sbr.rel (%p290) target = $region48
        $region47: #{tpu_custom_call.1} parent=39 // pred_region
          %293 = dma.done [#allocation7], 1024
        $region48: #{tpu_custom_call.1} parent=39 // pred_fallthru
          _
        // Predicated region
        $region49: #{tpu_custom_call.1} parent=39 // pred_check
          %p294 = pneg %p109
        $region50: #{tpu_custom_call.1} parent=39 // pred_check_branch
          %296 = sbr.rel (%p294) target = $region52
        $region51: #{tpu_custom_call.1} parent=39 // pred_region
          %297 = dma.done [#allocation7], 16
        $region52: #{tpu_custom_call.1} parent=39 // pred_fallthru
          _
        // Predicated region
        $region53: #{tpu_custom_call.1} parent=39 // pred_check
          %p298 = pneg %p135
        $region54: #{tpu_custom_call.1} parent=39 // pred_check_branch
          %300 = sbr.rel (%p298) target = $region56
        $region55: #{tpu_custom_call.1} parent=39 // pred_region
          %301 = dma.done [#allocation10], 512
        $region56: #{tpu_custom_call.1} parent=39 // pred_fallthru
          _
        // Predicated region
        $region57: #{tpu_custom_call.1} parent=39 // pred_check
          %p302 = pneg %p156
        $region58: #{tpu_custom_call.1} parent=39 // pred_check_branch
          %304 = sbr.rel (%p302) target = $region60
        $region59: #{tpu_custom_call.1} parent=39 // pred_region
          %305 = dma.done [#allocation10], 16
        $region60: #{tpu_custom_call.1} parent=39 // pred_fallthru
          _
        %s306 = sand.u32 %s44, 1
        %s307 = scalar_lea.sflag [#allocation4], %s306
        %s308 = sand.u32 %s44, 1
        %s309 = smul.addr %s308, 8
        %s310 = scalar_lea.vmem [#allocation3], %s309
        %p311 = pneg %p57
        %p312 = pneg %p54
        %p313 = pneg %p83
        %p314 = pneg %p80
        %p315 = pneg %p109
        %p316 = pneg %p106
        %p317 = pneg %p135
        %p318 = pneg %p132
        %p319 = pneg %p156
        %p320 = pneg %p153
        %p321 = pneg %p182
        %p322 = pneg %p179
        %s323 = sand.u32 %s169, 1
        %s324 = scalar_lea.sflag [#allocation5], %s323
        %s325 = sand.u32 %s169, 1
        %s326 = smul.addr %s325, 8
        %s327 = scalar_lea.vmem [#allocation12], %s326
        %s328 = smul.u32 8, %s29
        %p329 = scmp.eq.s32.totalorder %s29, 0
        // Predicated region
        $region61: #{tpu_custom_call.1} parent=39 // pred_check
          %p330 = pneg %p329
        $region62: #{tpu_custom_call.1} parent=39 // pred_check_branch
          %332 = sbr.rel (%p330) target = $region64
        $region63: #{tpu_custom_call.1} parent=39 // pred_region
          %vm333 = vcmask 261120
          %334 = vst.msk [vmem:[#allocation2] sm:$0xff] %vm333, 0.0
        $region64: #{tpu_custom_call.1} parent=39 // pred_fallthru
          _
        %v335 = vld [vmem:[%s285] sm:$0xff]
        %v336 = vld [vmem:[#allocation6] sm:$0xff]
        %v337 = vld [vmem:[#allocation6 + $0x8] sm:$0xff]
        %v338 = vld [vmem:[#allocation6 + $0x10] sm:$0xff]
        %v339 = vld [vmem:[#allocation6 + $0x18] sm:$0xff]
        %v340 = vld [vmem:[#allocation6 + $0x20] sm:$0xff]
        %v341 = vld [vmem:[#allocation6 + $0x28] sm:$0xff]
        %v342 = vld [vmem:[#allocation6 + $0x30] sm:$0xff]
        %v343 = vld [vmem:[#allocation6 + $0x38] sm:$0xff]
        %v344 = vld [vmem:[#allocation8] sm:$0x1]
        %v346 = vlaneseq
        %v347 = vshrl.u32 %v346, 7
        %v348 = vsub.s32 0, %v347
        %v349 = vrot.slane %v344, %v348
        %vm351 = vcmask 261120
        %v353 = vsel %vm351, %v335, 0
        %v356 = vsel %vm351, %v336, 0
        %v359 = vsel %vm351, %v337, 0
        %v362 = vsel %vm351, %v338, 0
        %v365 = vsel %vm351, %v339, 0
        %v368 = vsel %vm351, %v340, 0
        %v371 = vsel %vm351, %v341, 0
        %v374 = vsel %vm351, %v342, 0
        %v377 = vsel %vm351, %v343, 0
        %379 = vmatprep.subr.mxu0 0.0
        %380 = vmatpush1.xpose.msra.mxu0 %v356
        %381 = vmatprep.subr.mxu0 0.0
        %382 = vmatpush1.xpose.msra.mxu0 %v359
        %383 = vmatprep.subr.mxu0 0.0
        %384 = vmatpush1.xpose.msra.mxu0 %v362
        %385 = vmatprep.subr.mxu0 0.0
        %386 = vmatpush1.xpose.msra.mxu0 %v365
        %387 = vmatprep.subr.mxu0 0.0
        %388 = vmatpush1.xpose.msra.mxu0 %v368
        %389 = vmatprep.subr.mxu0 0.0
        %390 = vmatpush1.xpose.msra.mxu0 %v371
        %391 = vmatprep.subr.mxu0 0.0
        %392 = vmatpush1.xpose.msra.mxu0 %v374
        %393 = vmatprep.subr.mxu0 0.0
        %394 = vmatpush1.xpose.msra.mxu0 %v377
        %395 = vmatprep.subr.mxu0 0.0
        %396 = vmatpush1.xpose.msra.mxu0 0.0
        %397 = vmatprep.subr.mxu0 0.0
        %398 = vmatpush1.xpose.msra.mxu0 0.0
        %399 = vmatprep.subr.mxu0 0.0
        %400 = vmatpush1.xpose.msra.mxu0 0.0
        %401 = vmatprep.subr.mxu0 0.0
        %402 = vmatpush1.xpose.msra.mxu0 0.0
        %403 = vmatprep.subr.mxu0 0.0
        %404 = vmatpush1.xpose.msra.mxu0 0.0
        %405 = vmatprep.subr.mxu0 0.0
        %406 = vmatpush1.xpose.msra.mxu0 0.0
        %407 = vmatprep.subr.mxu0 0.0
        %408 = vmatpush1.xpose.msra.mxu0 0.0
        %409 = vmatprep.subr.mxu0 0.0
        %410 = vmatpush1.xpose.msra.mxu0 0.0
        %411 = vmatprep.subr.mxu0 0.0
        %412 = vmatpush1.xpose.msra.mxu0 0.0
        %413 = vmatprep.subr.mxu0 0.0
        %414 = vmatpush1.xpose.msra.mxu0 0.0
        %415 = vmatprep.subr.mxu0 0.0
        %416 = vmatpush1.xpose.msra.mxu0 0.0
        %417 = vmatprep.subr.mxu0 0.0
        %418 = vmatpush1.xpose.msra.mxu0 0.0
        %419 = vmatprep.subr.mxu0 0.0
        %420 = vmatpush1.xpose.msra.mxu0 0.0
        %421 = vmatprep.subr.mxu0 0.0
        %422 = vmatpush1.xpose.msra.mxu0 0.0
        %423 = vmatprep.subr.mxu0 0.0
        %424 = vmatpush1.xpose.msra.mxu0 0.0
        %425 = vmatprep.subr.mxu0 0.0
        %426 = vmatpush1.xpose.msra.mxu0 0.0
        %427 = vmatprep.subr.mxu0 0.0
        %428 = vmatpush1.xpose.msra.mxu0 0.0
        %429 = vmatprep.subr.mxu0 0.0
        %430 = vmatpush1.xpose.msra.mxu0 0.0
        %431 = vmatprep.subr.mxu0 0.0
        %432 = vmatpush1.xpose.msra.mxu0 0.0
        %433 = vmatprep.subr.mxu0 0.0
        %434 = vmatpush1.xpose.msra.mxu0 0.0
        %435 = vmatprep.subr.mxu0 0.0
        %436 = vmatpush1.xpose.msra.mxu0 0.0
        %437 = vmatprep.subr.mxu0 0.0
        %438 = vmatpush1.xpose.msra.mxu0 0.0
        %439 = vmatprep.subr.mxu0 0.0
        %440 = vmatpush1.xpose.msra.mxu0 0.0
        %441 = vmatprep.subr.mxu0 0.0
        %442 = vmatpush1.xpose.msra.mxu0 0.0
        %443 = vmatprep.mubr.f32.mxu0 0.0
        %444 = vmatmul.mubr.f32.gmra.mrb[0].mxu0 %v353
        %v445 = vpop.f32.mrb[0].mxu0
        %v446 = vadd.f32 %v349, %v445
        %v447 = vpop.f32.mrb[0].mxu0
        %448 = vdwg.mxu0
        %v449 = vmax.f32 %v446, 0.0
        %v450 = vld [vmem:[#allocation2] sm:$0xff]
        %v451 = vld [vmem:[#allocation9] sm:$0xff]
        %v452 = vld [vmem:[#allocation9 + $0x8] sm:$0xff]
        %v453 = vld [vmem:[#allocation9 + $0x10] sm:$0xff]
        %v454 = vld [vmem:[#allocation9 + $0x18] sm:$0xff]
        %vm455 = vcmask 523264
        %v457 = vsel %vm455, %v449, 0
        %v460 = vsel %vm455, %v451, 0
        %v463 = vsel %vm455, %v452, 0
        %v466 = vsel %vm455, %v453, 0
        %v469 = vsel %vm455, %v454, 0
        %471 = vmatprep.subr.mxu0 0.0
        %472 = vmatpush1.xpose.msra.mxu0 %v460
        %473 = vmatprep.subr.mxu0 0.0
        %474 = vmatpush1.xpose.msra.mxu0 %v463
        %475 = vmatprep.subr.mxu0 0.0
        %476 = vmatpush1.xpose.msra.mxu0 %v466
        %477 = vmatprep.subr.mxu0 0.0
        %478 = vmatpush1.xpose.msra.mxu0 %v469
        %479 = vmatprep.subr.mxu0 0.0
        %480 = vmatpush1.xpose.msra.mxu0 0.0
        %481 = vmatprep.subr.mxu0 0.0
        %482 = vmatpush1.xpose.msra.mxu0 0.0
        %483 = vmatprep.subr.mxu0 0.0
        %484 = vmatpush1.xpose.msra.mxu0 0.0
        %485 = vmatprep.subr.mxu0 0.0
        %486 = vmatpush1.xpose.msra.mxu0 0.0
        %487 = vmatprep.subr.mxu0 0.0
        %488 = vmatpush1.xpose.msra.mxu0 0.0
        %489 = vmatprep.subr.mxu0 0.0
        %490 = vmatpush1.xpose.msra.mxu0 0.0
        %491 = vmatprep.subr.mxu0 0.0
        %492 = vmatpush1.xpose.msra.mxu0 0.0
        %493 = vmatprep.subr.mxu0 0.0
        %494 = vmatpush1.xpose.msra.mxu0 0.0
        %495 = vmatprep.subr.mxu0 0.0
        %496 = vmatpush1.xpose.msra.mxu0 0.0
        %497 = vmatprep.subr.mxu0 0.0
        %498 = vmatpush1.xpose.msra.mxu0 0.0
        %499 = vmatprep.subr.mxu0 0.0
        %500 = vmatpush1.xpose.msra.mxu0 0.0
        %501 = vmatprep.subr.mxu0 0.0
        %502 = vmatpush1.xpose.msra.mxu0 0.0
        %503 = vmatprep.subr.mxu0 0.0
        %504 = vmatpush1.xpose.msra.mxu0 0.0
        %505 = vmatprep.subr.mxu0 0.0
        %506 = vmatpush1.xpose.msra.mxu0 0.0
        %507 = vmatprep.subr.mxu0 0.0
        %508 = vmatpush1.xpose.msra.mxu0 0.0
        %509 = vmatprep.subr.mxu0 0.0
        %510 = vmatpush1.xpose.msra.mxu0 0.0
        %511 = vmatprep.subr.mxu0 0.0
        %512 = vmatpush1.xpose.msra.mxu0 0.0
        %513 = vmatprep.subr.mxu0 0.0
        %514 = vmatpush1.xpose.msra.mxu0 0.0
        %515 = vmatprep.subr.mxu0 0.0
        %516 = vmatpush1.xpose.msra.mxu0 0.0
        %517 = vmatprep.subr.mxu0 0.0
        %518 = vmatpush1.xpose.msra.mxu0 0.0
        %519 = vmatprep.subr.mxu0 0.0
        %520 = vmatpush1.xpose.msra.mxu0 0.0
        %521 = vmatprep.subr.mxu0 0.0
        %522 = vmatpush1.xpose.msra.mxu0 0.0
        %523 = vmatprep.subr.mxu0 0.0
        %524 = vmatpush1.xpose.msra.mxu0 0.0
        %525 = vmatprep.subr.mxu0 0.0
        %526 = vmatpush1.xpose.msra.mxu0 0.0
        %527 = vmatprep.subr.mxu0 0.0
        %528 = vmatpush1.xpose.msra.mxu0 0.0
        %529 = vmatprep.subr.mxu0 0.0
        %530 = vmatpush1.xpose.msra.mxu0 0.0
        %531 = vmatprep.subr.mxu0 0.0
        %532 = vmatpush1.xpose.msra.mxu0 0.0
        %533 = vmatprep.subr.mxu0 0.0
        %534 = vmatpush1.xpose.msra.mxu0 0.0
        %535 = vmatprep.mubr.f32.mxu0 0.0
        %536 = vmatmul.mubr.f32.gmra.mrb[0].mxu0 %v457
        %v537 = vpop.f32.mrb[0].mxu0
        %v538 = vadd.f32 0.0, %v537
        %v539 = vpop.f32.mrb[0].mxu0
        %540 = vdwg.mxu0
        %v541 = vadd.f32 %v450, %v538
        %542 = vst.msk [vmem:[#allocation2] sm:$0xff] %vm351, %v541
        // Predicated region
        $region65: #{tpu_custom_call.1} parent=39 // pred_check
          %p543 = pneg %p329
        $region66: #{tpu_custom_call.1} parent=39 // pred_check_branch
          %545 = sbr.rel (%p543) target = $region68
        $region67: #{tpu_custom_call.1} parent=39 // pred_region
          %v546 = vld [vmem:[#allocation2] sm:$0xff]
          %v547 = vld [vmem:[#allocation11] sm:$0x1]
          %v549 = vlaneseq
          %v550 = vshrl.u32 %v549, 7
          %v551 = vsub.s32 0, %v550
          %v552 = vrot.slane %v547, %v551
          %v554 = vadd.f32 %v546, %v552
          %555 = vst.msk [vmem:[%s327] sm:$0xff] %vm351, %v554
        $region68: #{tpu_custom_call.1} parent=39 // pred_fallthru
          _
        %s556 = sand.u32 %s169, 1
        %s557 = scalar_lea.sflag [#allocation5], %s556
        %s558 = sand.u32 %s169, 1
        %s559 = smul.addr %s558, 8
        %s560 = scalar_lea.vmem [#allocation12], %s559
        // Predicated region
        $region69: #{tpu_custom_call.1} parent=39 // pred_check
          %p561 = pneg %p179
        $region70: #{tpu_custom_call.1} parent=39 // pred_check_branch
          %563 = sbr.rel (%p561) target = $region72
        $region71: #{tpu_custom_call.1} parent=39 // pred_region
          %s565 = ssub.s32 128, 128
          %566 = vsyncadd %s557, %s565
          %s567 = smul.addr %s28, 128
          %s568 = scalar_lea.hbm %s5, %s567
          %s570 = sshll.u32 %s560, 4
          %s571 = int_to_ptr.vmem [resolvable:$true] %s570
          %573 = dma.vmem_to_hbm [thread:$0]  %s571, 128, %s568, %s557
        $region72: #{tpu_custom_call.1} parent=39 // pred_fallthru
          _
      $region40: #{tpu_custom_call.1} parent=5 // pred_fallthru
        _
      %p574 = scmp.le.s32.totalorder 2, %s19
      // Predicated region
      $region73: #{tpu_custom_call.1} parent=5 // pred_check
        %p575 = pneg %p574
      $region74: #{tpu_custom_call.1} parent=5 // pred_check_branch
        %577 = sbr.rel (%p575) target = $region76
      $region75: #{tpu_custom_call.1} parent=5 // pred_region
        %s578 = ssub.s32 %s19, 2
        // Predicated region
        $region77: #{tpu_custom_call.1} parent=75 // pred_check
          %p579 = pneg %p185
        $region78: #{tpu_custom_call.1} parent=75 // pred_check_branch
          %581 = sbr.rel (%p579) target = $region80
        $region79: #{tpu_custom_call.1} parent=75 // pred_region
          %s582 = sand.u32 %s170, 1
          %s583 = scalar_lea.sflag [#allocation5], %s582
          %s584 = sand.u32 %s170, 1
          %s585 = smul.addr %s584, 8
          %s586 = scalar_lea.vmem [#allocation12], %s585
          %587 = dma.done %s583, 128
        $region80: #{tpu_custom_call.1} parent=75 // pred_fallthru
          _
      $region76: #{tpu_custom_call.1} parent=5 // pred_fallthru
        _
    $region6: #{tpu_custom_call.1} parent=1 // loop_footer
      %s23 = sadd.s32 1, %s19
    $region7: #{tpu_custom_call.1} parent=1 // loop_footer_branch
      %18 = sbr.rel target = $region3
    $region8: #{tpu_custom_call.1} parent=1 // loop_exit
      _
    %588 = vsyncpa [#allocation4], 1
    %s589 = scalar_lea.sflag [#allocation4], 1
    %590 = vsyncpa %s589, 1
    %591 = vsyncpa [#allocation7], 1
    %592 = vsyncpa [#allocation10], 1
    %593 = vsyncpa [#allocation5], 1
    %s594 = scalar_lea.sflag [#allocation5], 1
    %595 = vsyncpa %s594, 1

</llo_original>
